<compile_context>
chip_gen: v7x
topology: tpu7x:2x2x1
jax: 0.10.0
libtpu: 0.0.40
codegen_flags: <defaults>
</compile_context>

<pallas_src>
import functools

import jax
import jax.numpy as jnp
from jax.experimental import pallas as pl
from jax.experimental.pallas import tpu as pltpu


_NEG_SLOPE = 0.2
_DEFAULT_TILE_COLS = 4096   # slab columns per grid step (each column = G batch rows)


def _round_up(x, m):
    return ((x + m - 1) // m) * m


def _make_kernel(num_layers):
    """Fused block-diagonal MLP forward.

    refs = (x_ref, w1, b1, ..., wL, bL, out_ref)
      x_ref : (T, G*D)       f32   natural batch-major block (contiguous DMA)
      w_l   : (G*out, G*in)  bf16  blockdiag(G copies of the Linear weight), resident
      b_l   : (G*out, 1)     f32   tiled bias, lane-broadcast
      out   : (G, T)         f32   lane-dense; out[g, j] = xi(batch row j*G+g of tile)
    """
    def kernel(*refs):
        x_ref, out_ref = refs[0], refs[-1]
        wb = refs[1:-1]
        neg = jnp.float32(_NEG_SLOPE)

        # Layer 1: contract the packed feature dim of BOTH operands (rhs-"transposed"
        # dot, same pattern as q @ k^T) -> (G*out1, T).  No transpose op anywhere.
        x = x_ref[...].astype(jnp.bfloat16)                       # (T, G*D) bf16
        h = jax.lax.dot_general(wb[0][...], x, (((1,), (1,)), ((), ())),
                                preferred_element_type=jnp.float32)
        h = h + wb[1][...]
        if num_layers > 1:
            h = jnp.maximum(h, neg * h)                           # LeakyReLU(0.2)

        # Remaining layers: standard (G*out, G*in) @ (G*in, T) packed dots.
        for lyr in range(1, num_layers):
            w_ref, b_ref = wb[2 * lyr], wb[2 * lyr + 1]
            h = jnp.dot(w_ref[...], h.astype(jnp.bfloat16),
                        preferred_element_type=jnp.float32) + b_ref[...]
            if lyr < num_layers - 1:
                h = jnp.maximum(h, neg * h)

        out_ref[...] = jnp.abs(h).astype(out_ref.dtype)           # final abs, (G, T)

    return kernel


@functools.partial(jax.jit, static_argnames=("input_dim", "tile_cols"))
def generator_xi_forward(z, params, *, input_dim, tile_cols=_DEFAULT_TILE_COLS):
    """z: anything reshapable to (-1, input_dim). Returns xi of shape (N, 1), f32."""
    z2d = z.reshape(-1, input_dim)
    n = z2d.shape[0]

    dims = [input_dim] + [w.shape[0] for w, _ in params]
    g = max(1, 128 // max(dims))              # packing factor: G * max_dim <= 128

    # Pad batch only to a multiple of G (<= G-1 zero rows).  Tile granularity is
    # handled by Pallas ragged last blocks, NOT by rounding N up to a tile multiple.
    n_pad = _round_up(n, g)
    if n_pad != n:
        z2d = jnp.pad(z2d, ((0, n_pad - n), (0, 0)))
    n_cols = n_pad // g

    # Free bitcast reshape: slab column j holds batch rows j*G .. j*G + G-1.
    zp = z2d.reshape(n_cols, g * input_dim)

    # Tile selection: multiples of 128 (lane-dense output stores).  Keep >= 4 grid
    # steps when the batch is large enough so both v7x TensorCores get work.
    tile_cols = max(128, 128 * (tile_cols // 128))
    if n_cols <= tile_cols:
        t_cols = n_cols                        # single full-extent block (always legal)
    else:
        t_cols = tile_cols
        while t_cols >= 256 and pl.cdiv(n_cols, t_cols) < 4:
            t_cols //= 2
    grid = (pl.cdiv(n_cols, t_cols),)

    flat_args = [zp]
    in_specs = [pl.BlockSpec((t_cols, g * input_dim), lambda i: (i, 0))]
    for w, b in params:
        out_d = w.shape[0]
        w_bd = jnp.kron(jnp.eye(g, dtype=jnp.float32),
                        w.astype(jnp.float32)).astype(jnp.bfloat16)       # (G*out, G*in)
        b_bd = jnp.tile(b.reshape(out_d, 1).astype(jnp.float32), (g, 1))  # (G*out, 1)
        flat_args += [w_bd, b_bd]
        in_specs += [
            pl.BlockSpec(w_bd.shape, lambda i: (0, 0)),    # resident packed weights
            pl.BlockSpec(b_bd.shape, lambda i: (0, 0)),    # resident packed biases
        ]

    # Advisory cost: counts the packed MXU work actually issued.
    flops = 2 * n_cols * sum((g * a) * (g * o) for a, o in zip(dims[:-1], dims[1:]))
    bytes_accessed = (n_pad * input_dim * 4                 # f32 z read (natural layout)
                      + g * n_cols * 4                      # f32 xi write
                      + sum((g * o) * (g * a) * 2 + (g * o) * 4
                            for a, o in zip(dims[:-1], dims[1:])))

    out = pl.pallas_call(
        _make_kernel(len(params)),
        out_shape=jax.ShapeDtypeStruct((g, n_cols), jnp.float32),
        grid=grid,
        in_specs=in_specs,
        out_specs=pl.BlockSpec((g, t_cols), lambda i: (0, i)),
        compiler_params=pltpu.CompilerParams(
            # Batch axis is embarrassingly parallel -> megacore sharding on v7x.
            dimension_semantics=("parallel",),
            vmem_limit_bytes=32 * 1024 * 1024,
        ),
        cost_estimate=pl.CostEstimate(
            flops=int(flops), transcendentals=0,
            bytes_accessed=int(bytes_accessed)),
    )(*flat_args)

    # Untangle interleaving: out[g, j] -> batch row j*G + g.  Tiny (~4 B/row) op.
    return out.T.reshape(n_pad, 1)[:n]


def init_params(key, input_dim, hidden_units):
    """nn.Linear-style init. Weights stored (out, in) like torch; biases (out, 1). f32."""
    dims = [input_dim] + list(hidden_units) + [1]
    params = []
    for lyr in range(len(dims) - 1):
        fan_in, fan_out = dims[lyr], dims[lyr + 1]
        key, kw, kb = jax.random.split(key, 3)
        bound = float(1.0 / (fan_in ** 0.5))
        w = jax.random.uniform(kw, (fan_out, fan_in), jnp.float32, -bound, bound)
        b = jax.random.uniform(kb, (fan_out, 1), jnp.float32, -bound, bound)
        params.append((w, b))
    return params


def reference_forward_f32(z, params, input_dim):
    """Plain-JAX f32 reference (matches the PyTorch module semantics)."""
    x = z.reshape(-1, input_dim).astype(jnp.float32)
    nl = len(params)
    for i, (w, b) in enumerate(params):
        x = x @ w.T.astype(jnp.float32) + b.reshape(1, -1).astype(jnp.float32)
        if i < nl - 1:
            x = jnp.where(x >= 0, x, _NEG_SLOPE * x)
    return jnp.abs(x)


def reference_forward_bf16(z, params, input_dim):
    """Plain-JAX reference mirroring the kernel's bf16-operand / f32-accumulate math."""
    h = z.reshape(-1, input_dim).astype(jnp.float32)
    nl = len(params)
    for i, (w, b) in enumerate(params):
        h = jax.lax.dot_general(h.astype(jnp.bfloat16), w.astype(jnp.bfloat16),
                                (((1,), (1,)), ((), ())),
                                preferred_element_type=jnp.float32)
        h = h + b.reshape(1, -1).astype(jnp.float32)
        if i < nl - 1:
            h = jnp.maximum(h, _NEG_SLOPE * h)
    return jnp.abs(h)                                          # (N, 1)


if __name__ == "__main__":
    input_dim = 8
    hidden_units = [24, 12, 8]     # network: 8 - 24 - 12 - 8 - 1
    batch = 16

    key = jax.random.PRNGKey(0)
    key_params, key_z, key_z2 = jax.random.split(key, 3)
    params = init_params(key_params, input_dim, hidden_units)

    # --- small demo batch ---------------------------------------------------
    z = jax.random.normal(key_z, (batch, input_dim), jnp.float32)
    xi = generator_xi_forward(z, params, input_dim=input_dim)
    xi = jax.block_until_ready(xi)

    assert xi.shape == (batch, 1)
    xi_bf = reference_forward_bf16(z, params, input_dim)
    xi_f32 = reference_forward_f32(z, params, input_dim)
    assert jnp.allclose(xi, xi_bf, atol=1e-4, rtol=1e-3), "mismatch vs bf16-mirrored reference"
    assert jnp.allclose(xi, xi_f32, atol=5e-2, rtol=5e-2), "mismatch vs f32 reference"
    assert bool(jnp.all(xi >= 0)), "abs() output must be nonnegative"

    # --- exercise G-padding, multi-step grid and the ragged last block -------
    z2 = jax.random.normal(key_z2, (2049, input_dim), jnp.float32)   # 2049 % G != 0
    xi2 = generator_xi_forward(z2, params, input_dim=input_dim, tile_cols=128)
    xi2 = jax.block_until_ready(xi2)
    assert xi2.shape == (2049, 1)
    assert jnp.allclose(xi2, reference_forward_bf16(z2, params, input_dim),
                        atol=1e-4, rtol=1e-3), "ragged-grid mismatch vs bf16 reference"
    assert jnp.allclose(xi2, reference_forward_f32(z2, params, input_dim),
                        atol=5e-2, rtol=5e-2), "ragged-grid mismatch vs f32 reference"

    print("KERNEL_OK")
</pallas_src>

<mosaic_0001>
module attributes {stable_mosaic.version = 11 : i64} {
  func.func @kernel(%arg0: i32, %arg1: memref<4x40xf32, #tpu.memory_space<vmem>>, %arg2: memref<120x40xbf16, #tpu.memory_space<vmem>>, %arg3: memref<120x1xf32, #tpu.memory_space<vmem>>, %arg4: memref<60x120xbf16, #tpu.memory_space<vmem>>, %arg5: memref<60x1xf32, #tpu.memory_space<vmem>>, %arg6: memref<40x60xbf16, #tpu.memory_space<vmem>>, %arg7: memref<40x1xf32, #tpu.memory_space<vmem>>, %arg8: memref<5x40xbf16, #tpu.memory_space<vmem>>, %arg9: memref<5x1xf32, #tpu.memory_space<vmem>>, %arg10: memref<5x4xf32, #tpu.memory_space<vmem>>) attributes {dimension_semantics = [#tpu.dimension_semantics<parallel>], iteration_bounds = array<i64: 1>, scalar_prefetch = 0 : i64, scratch_operands = 0 : i64, tpu.core_type = #tpu.core_type<tc>, window_params = [{transform_indices = @transform_0, window_bounds = array<i64: 4, 40>}, {pipeline_mode = #tpu.pipeline_mode<synchronous>, transform_indices = @transform_1, window_bounds = array<i64: 120, 40>}, {pipeline_mode = #tpu.pipeline_mode<synchronous>, transform_indices = @transform_2, window_bounds = array<i64: 120, 1>}, {pipeline_mode = #tpu.pipeline_mode<synchronous>, transform_indices = @transform_3, window_bounds = array<i64: 60, 120>}, {pipeline_mode = #tpu.pipeline_mode<synchronous>, transform_indices = @transform_4, window_bounds = array<i64: 60, 1>}, {pipeline_mode = #tpu.pipeline_mode<synchronous>, transform_indices = @transform_5, window_bounds = array<i64: 40, 60>}, {pipeline_mode = #tpu.pipeline_mode<synchronous>, transform_indices = @transform_6, window_bounds = array<i64: 40, 1>}, {pipeline_mode = #tpu.pipeline_mode<synchronous>, transform_indices = @transform_7, window_bounds = array<i64: 5, 40>}, {pipeline_mode = #tpu.pipeline_mode<synchronous>, transform_indices = @transform_8, window_bounds = array<i64: 5, 1>}, {transform_indices = @transform_9, window_bounds = array<i64: 5, 4>}]} {
    %c0 = arith.constant 0 : index
    %c0_0 = arith.constant 0 : index
    %0 = vector.load %arg1[%c0, %c0_0] : memref<4x40xf32, #tpu.memory_space<vmem>>, vector<4x40xf32>
    %1 = arith.truncf %0 : vector<4x40xf32> to vector<4x40xbf16>
    %c0_1 = arith.constant 0 : index
    %c0_2 = arith.constant 0 : index
    %2 = vector.load %arg2[%c0_1, %c0_2] : memref<120x40xbf16, #tpu.memory_space<vmem>>, vector<120x40xbf16>
    %cst = arith.constant dense<0.000000e+00> : vector<120x4xf32>
    %3 = tpu.matmul %2, %1, %cst {dimension_numbers = #tpu.dot_dimension_numbers<[1], [1], [0], [0], [0, 0, 1, 0], [], []>} : vector<120x40xbf16>, vector<4x40xbf16>, vector<120x4xf32> -> vector<120x4xf32>
    %c0_3 = arith.constant 0 : index
    %c0_4 = arith.constant 0 : index
    %4 = vector.load %arg3[%c0_3, %c0_4] : memref<120x1xf32, #tpu.memory_space<vmem>>, vector<120x1xf32>
    %5 = vector.broadcast %4 : vector<120x1xf32> to vector<120x4xf32>
    %6 = arith.addf %3, %5 : vector<120x4xf32>
    %cst_5 = arith.constant 2.000000e-01 : f32
    %7 = vector.broadcast %cst_5 : f32 to vector<120x4xf32>
    %8 = arith.mulf %7, %6 : vector<120x4xf32>
    %9 = arith.maximumf %6, %8 : vector<120x4xf32>
    %c0_6 = arith.constant 0 : index
    %c0_7 = arith.constant 0 : index
    %10 = vector.load %arg4[%c0_6, %c0_7] : memref<60x120xbf16, #tpu.memory_space<vmem>>, vector<60x120xbf16>
    %11 = arith.truncf %9 : vector<120x4xf32> to vector<120x4xbf16>
    %cst_8 = arith.constant dense<0.000000e+00> : vector<60x4xf32>
    %12 = tpu.matmul %10, %11, %cst_8 {dimension_numbers = #tpu.dot_dimension_numbers<[1], [0], [0], [1], [0, 0, 1, 1], [], []>} : vector<60x120xbf16>, vector<120x4xbf16>, vector<60x4xf32> -> vector<60x4xf32>
    %c0_9 = arith.constant 0 : index
    %c0_10 = arith.constant 0 : index
    %13 = vector.load %arg5[%c0_9, %c0_10] : memref<60x1xf32, #tpu.memory_space<vmem>>, vector<60x1xf32>
    %14 = vector.broadcast %13 : vector<60x1xf32> to vector<60x4xf32>
    %15 = arith.addf %12, %14 : vector<60x4xf32>
    %cst_11 = arith.constant 2.000000e-01 : f32
    %16 = vector.broadcast %cst_11 : f32 to vector<60x4xf32>
    %17 = arith.mulf %16, %15 : vector<60x4xf32>
    %18 = arith.maximumf %15, %17 : vector<60x4xf32>
    %c0_12 = arith.constant 0 : index
    %c0_13 = arith.constant 0 : index
    %19 = vector.load %arg6[%c0_12, %c0_13] : memref<40x60xbf16, #tpu.memory_space<vmem>>, vector<40x60xbf16>
    %20 = arith.truncf %18 : vector<60x4xf32> to vector<60x4xbf16>
    %cst_14 = arith.constant dense<0.000000e+00> : vector<40x4xf32>
    %21 = tpu.matmul %19, %20, %cst_14 {dimension_numbers = #tpu.dot_dimension_numbers<[1], [0], [0], [1], [0, 0, 1, 1], [], []>} : vector<40x60xbf16>, vector<60x4xbf16>, vector<40x4xf32> -> vector<40x4xf32>
    %c0_15 = arith.constant 0 : index
    %c0_16 = arith.constant 0 : index
    %22 = vector.load %arg7[%c0_15, %c0_16] : memref<40x1xf32, #tpu.memory_space<vmem>>, vector<40x1xf32>
    %23 = vector.broadcast %22 : vector<40x1xf32> to vector<40x4xf32>
    %24 = arith.addf %21, %23 : vector<40x4xf32>
    %cst_17 = arith.constant 2.000000e-01 : f32
    %25 = vector.broadcast %cst_17 : f32 to vector<40x4xf32>
    %26 = arith.mulf %25, %24 : vector<40x4xf32>
    %27 = arith.maximumf %24, %26 : vector<40x4xf32>
    %c0_18 = arith.constant 0 : index
    %c0_19 = arith.constant 0 : index
    %28 = vector.load %arg8[%c0_18, %c0_19] : memref<5x40xbf16, #tpu.memory_space<vmem>>, vector<5x40xbf16>
    %29 = arith.truncf %27 : vector<40x4xf32> to vector<40x4xbf16>
    %cst_20 = arith.constant dense<0.000000e+00> : vector<5x4xf32>
    %30 = tpu.matmul %28, %29, %cst_20 {dimension_numbers = #tpu.dot_dimension_numbers<[1], [0], [0], [1], [0, 0, 1, 1], [], []>} : vector<5x40xbf16>, vector<40x4xbf16>, vector<5x4xf32> -> vector<5x4xf32>
    %c0_21 = arith.constant 0 : index
    %c0_22 = arith.constant 0 : index
    %31 = vector.load %arg9[%c0_21, %c0_22] : memref<5x1xf32, #tpu.memory_space<vmem>>, vector<5x1xf32>
    %32 = vector.broadcast %31 : vector<5x1xf32> to vector<5x4xf32>
    %33 = arith.addf %30, %32 : vector<5x4xf32>
    %34 = math.absf %33 : vector<5x4xf32>
    %c0_23 = arith.constant 0 : index
    %c0_24 = arith.constant 0 : index
    %35 = vector.load %arg10[%c0_23, %c0_24] : memref<5x4xf32, #tpu.memory_space<vmem>>, vector<5x4xf32>
    tpu.vector_store %arg10[%c0_23, %c0_24], %34 {strides = array<i32>} : memref<5x4xf32, #tpu.memory_space<vmem>>, vector<5x4xf32>,
    return
  }
  func.func @transform_0(%arg0: i32) -> (i32, i32) {
    %c0_i32 = arith.constant 0 : i32
    %c0_i32_0 = arith.constant 0 : i32
    return %arg0, %c0_i32 : i32, i32
  }
  func.func @transform_1(%arg0: i32) -> (i32, i32) {
    %c0_i32 = arith.constant 0 : i32
    %c0_i32_0 = arith.constant 0 : i32
    %c0_i32_1 = arith.constant 0 : i32
    return %c0_i32, %c0_i32_0 : i32, i32
  }
  func.func @transform_2(%arg0: i32) -> (i32, i32) {
    %c0_i32 = arith.constant 0 : i32
    %c0_i32_0 = arith.constant 0 : i32
    %c0_i32_1 = arith.constant 0 : i32
    return %c0_i32, %c0_i32_0 : i32, i32
  }
  func.func @transform_3(%arg0: i32) -> (i32, i32) {
    %c0_i32 = arith.constant 0 : i32
    %c0_i32_0 = arith.constant 0 : i32
    %c0_i32_1 = arith.constant 0 : i32
    return %c0_i32, %c0_i32_0 : i32, i32
  }
  func.func @transform_4(%arg0: i32) -> (i32, i32) {
    %c0_i32 = arith.constant 0 : i32
    %c0_i32_0 = arith.constant 0 : i32
    %c0_i32_1 = arith.constant 0 : i32
    return %c0_i32, %c0_i32_0 : i32, i32
  }
  func.func @transform_5(%arg0: i32) -> (i32, i32) {
    %c0_i32 = arith.constant 0 : i32
    %c0_i32_0 = arith.constant 0 : i32
    %c0_i32_1 = arith.constant 0 : i32
    return %c0_i32, %c0_i32_0 : i32, i32
  }
  func.func @transform_6(%arg0: i32) -> (i32, i32) {
    %c0_i32 = arith.constant 0 : i32
    %c0_i32_0 = arith.constant 0 : i32
    %c0_i32_1 = arith.constant 0 : i32
    return %c0_i32, %c0_i32_0 : i32, i32
  }
  func.func @transform_7(%arg0: i32) -> (i32, i32) {
    %c0_i32 = arith.constant 0 : i32
    %c0_i32_0 = arith.constant 0 : i32
    %c0_i32_1 = arith.constant 0 : i32
    return %c0_i32, %c0_i32_0 : i32, i32
  }
  func.func @transform_8(%arg0: i32) -> (i32, i32) {
    %c0_i32 = arith.constant 0 : i32
    %c0_i32_0 = arith.constant 0 : i32
    %c0_i32_1 = arith.constant 0 : i32
    return %c0_i32, %c0_i32_0 : i32, i32
  }
  func.func @transform_9(%arg0: i32) -> (i32, i32) {
    %c0_i32 = arith.constant 0 : i32
    %c0_i32_0 = arith.constant 0 : i32
    return %c0_i32, %arg0 : i32, i32
  }
}

</mosaic_0001>

<llo_original>
// kernel: generator_xi_forward.1
$region0: #{generator_xi_forward.1}
  #allocation0 [shape = 'u32[]', space=smem, size = 0x4, offset = 0x4, fixed_abs, tag = 'smem constant byte address 0x4 - core index']
  #allocation1 [shape = 'u32[144,128]{1,0:T(1,128)}', space=vmem, size = 0x12000, scoped, tag = 'internal scratch']
  %s0 = inlined_call_operand.vmem [shape: f32[4,40], index: 0, kind: input, shape index: {}]
  %s1 = inlined_call_operand.vmem [shape: bf16[120,40], index: 1, kind: input, shape index: {}]
  %s2 = inlined_call_operand.vmem [shape: f32[120,1], index: 2, kind: input, shape index: {}]
  %s3 = inlined_call_operand.vmem [shape: bf16[60,120], index: 3, kind: input, shape index: {}]
  %s4 = inlined_call_operand.vmem [shape: f32[60,1], index: 4, kind: input, shape index: {}]
  %s5 = inlined_call_operand.vmem [shape: bf16[40,60], index: 5, kind: input, shape index: {}]
  %s6 = inlined_call_operand.vmem [shape: f32[40,1], index: 6, kind: input, shape index: {}]
  %s7 = inlined_call_operand.vmem [shape: bf16[5,40], index: 7, kind: input, shape index: {}]
  %s8 = inlined_call_operand.vmem [shape: f32[5,1], index: 8, kind: input, shape index: {}]
  %s9 = inlined_call_operand.vmem [shape: f32[5,4], index: 9, kind: output, shape index: {}]
  %s10 = sld [smem:[#allocation0]]
  $region46: #{generator_xi_forward.1} parent=0
    _
  %s12 = ssub.s32 1, %s10
  %s13 = scalar_select 0, %s12, %s10
  // Predicated region
  $region2: #{generator_xi_forward.1} parent=0 // pred_check
    _
  $region3: #{generator_xi_forward.1} parent=0 // pred_check_branch
    %15 = sbr.rel (0) target = $region5
  $region4: #{generator_xi_forward.1} parent=0 // pred_region
    _
  $region5: #{generator_xi_forward.1} parent=0 // pred_fallthru
    _
  // Predicated region
  $region6: #{generator_xi_forward.1} parent=0 // pred_check
    _
  $region7: #{generator_xi_forward.1} parent=0 // pred_check_branch
    %17 = sbr.rel (0) target = $region9
  $region8: #{generator_xi_forward.1} parent=0 // pred_region
    _
  $region9: #{generator_xi_forward.1} parent=0 // pred_fallthru
    _
  // Predicated region
  $region10: #{generator_xi_forward.1} parent=0 // pred_check
    _
  $region11: #{generator_xi_forward.1} parent=0 // pred_check_branch
    %19 = sbr.rel (0) target = $region13
  $region12: #{generator_xi_forward.1} parent=0 // pred_region
    _
  $region13: #{generator_xi_forward.1} parent=0 // pred_fallthru
    _
  // Predicated region
  $region14: #{generator_xi_forward.1} parent=0 // pred_check
    _
  $region15: #{generator_xi_forward.1} parent=0 // pred_check_branch
    %21 = sbr.rel (0) target = $region17
  $region16: #{generator_xi_forward.1} parent=0 // pred_region
    _
  $region17: #{generator_xi_forward.1} parent=0 // pred_fallthru
    _
  // Predicated region
  $region18: #{generator_xi_forward.1} parent=0 // pred_check
    _
  $region19: #{generator_xi_forward.1} parent=0 // pred_check_branch
    %23 = sbr.rel (0) target = $region21
  $region20: #{generator_xi_forward.1} parent=0 // pred_region
    _
  $region21: #{generator_xi_forward.1} parent=0 // pred_fallthru
    _
  // Predicated region
  $region22: #{generator_xi_forward.1} parent=0 // pred_check
    _
  $region23: #{generator_xi_forward.1} parent=0 // pred_check_branch
    %25 = sbr.rel (0) target = $region25
  $region24: #{generator_xi_forward.1} parent=0 // pred_region
    _
  $region25: #{generator_xi_forward.1} parent=0 // pred_fallthru
    _
  // Predicated region
  $region26: #{generator_xi_forward.1} parent=0 // pred_check
    _
  $region27: #{generator_xi_forward.1} parent=0 // pred_check_branch
    %27 = sbr.rel (0) target = $region29
  $region28: #{generator_xi_forward.1} parent=0 // pred_region
    _
  $region29: #{generator_xi_forward.1} parent=0 // pred_fallthru
    _
  // Predicated region
  $region30: #{generator_xi_forward.1} parent=0 // pred_check
    _
  $region31: #{generator_xi_forward.1} parent=0 // pred_check_branch
    %29 = sbr.rel (0) target = $region33
  $region32: #{generator_xi_forward.1} parent=0 // pred_region
    _
  $region33: #{generator_xi_forward.1} parent=0 // pred_fallthru
    _
  // Predicated region
  $region34: #{generator_xi_forward.1} parent=0 // pred_check
    _
  $region35: #{generator_xi_forward.1} parent=0 // pred_check_branch
    %31 = sbr.rel (0) target = $region37
  $region36: #{generator_xi_forward.1} parent=0 // pred_region
    _
  $region37: #{generator_xi_forward.1} parent=0 // pred_fallthru
    _
  %v33 = vld [vmem:[%s0] sm:$0xf]
  %v34 = vpack.c.bf16 %v33, %v33
  %v35 = vld [vmem:[%s1] sm:$0xf]
  %v36 = vld [vmem:[%s1 + $0x4] sm:$0xf]
  %v37 = vld [vmem:[%s1 + $0x8] sm:$0xf]
  %v38 = vld [vmem:[%s1 + $0xc] sm:$0xf]
  %v39 = vld [vmem:[%s1 + $0x10] sm:$0xf]
  %v40 = vld [vmem:[%s1 + $0x14] sm:$0xf]
  %v41 = vld [vmem:[%s1 + $0x18] sm:$0xf]
  %v42 = vld [vmem:[%s1 + $0x1c] sm:$0xf]
  %v43 = vld [vmem:[%s1 + $0x20] sm:$0xf]
  %v44 = vld [vmem:[%s1 + $0x24] sm:$0xf]
  %v45 = vld [vmem:[%s1 + $0x28] sm:$0xf]
  %v46 = vld [vmem:[%s1 + $0x2c] sm:$0xf]
  %v47 = vld [vmem:[%s1 + $0x30] sm:$0xf]
  %v48 = vld [vmem:[%s1 + $0x34] sm:$0xf]
  %v49 = vld [vmem:[%s1 + $0x38] sm:$0xf]
  %v50 = vld [vmem:[%s2] sm:$0xff]
  %v51 = vld [vmem:[%s2 + $0x8] sm:$0xff]
  %v52 = vld [vmem:[%s2 + $0x10] sm:$0xff]
  %v53 = vld [vmem:[%s2 + $0x18] sm:$0xff]
  %v54 = vld [vmem:[%s2 + $0x20] sm:$0xff]
  %v55 = vld [vmem:[%s2 + $0x28] sm:$0xff]
  %v56 = vld [vmem:[%s2 + $0x30] sm:$0xff]
  %v57 = vld [vmem:[%s2 + $0x38] sm:$0xff]
  %v58 = vld [vmem:[%s2 + $0x40] sm:$0xff]
  %v59 = vld [vmem:[%s2 + $0x48] sm:$0xff]
  %v60 = vld [vmem:[%s2 + $0x50] sm:$0xff]
  %v61 = vld [vmem:[%s2 + $0x58] sm:$0xff]
  %v62 = vld [vmem:[%s2 + $0x60] sm:$0xff]
  %v63 = vld [vmem:[%s2 + $0x68] sm:$0xff]
  %v64 = vld [vmem:[%s2 + $0x70] sm:$0xff]
  %66 = vset.pattern.permute.xlu0 0
  %67 = vperm.xlu0 %66, %v50
  %v68 = vpop.permute.xlu0 %67
  %71 = vset.pattern.permute.xlu0 0
  %72 = vperm.xlu0 %71, %v51
  %v73 = vpop.permute.xlu0 %72
  %76 = vset.pattern.permute.xlu0 0
  %77 = vperm.xlu0 %76, %v52
  %v78 = vpop.permute.xlu0 %77
  %81 = vset.pattern.permute.xlu0 0
  %82 = vperm.xlu0 %81, %v53
  %v83 = vpop.permute.xlu0 %82
  %86 = vset.pattern.permute.xlu0 0
  %87 = vperm.xlu0 %86, %v54
  %v88 = vpop.permute.xlu0 %87
  %91 = vset.pattern.permute.xlu0 0
  %92 = vperm.xlu0 %91, %v55
  %v93 = vpop.permute.xlu0 %92
  %96 = vset.pattern.permute.xlu0 0
  %97 = vperm.xlu0 %96, %v56
  %v98 = vpop.permute.xlu0 %97
  %101 = vset.pattern.permute.xlu0 0
  %102 = vperm.xlu0 %101, %v57
  %v103 = vpop.permute.xlu0 %102
  %106 = vset.pattern.permute.xlu0 0
  %107 = vperm.xlu0 %106, %v58
  %v108 = vpop.permute.xlu0 %107
  %111 = vset.pattern.permute.xlu0 0
  %112 = vperm.xlu0 %111, %v59
  %v113 = vpop.permute.xlu0 %112
  %116 = vset.pattern.permute.xlu0 0
  %117 = vperm.xlu0 %116, %v60
  %v118 = vpop.permute.xlu0 %117
  %121 = vset.pattern.permute.xlu0 0
  %122 = vperm.xlu0 %121, %v61
  %v123 = vpop.permute.xlu0 %122
  %126 = vset.pattern.permute.xlu0 0
  %127 = vperm.xlu0 %126, %v62
  %v128 = vpop.permute.xlu0 %127
  %131 = vset.pattern.permute.xlu0 0
  %132 = vperm.xlu0 %131, %v63
  %v133 = vpop.permute.xlu0 %132
  %136 = vset.pattern.permute.xlu0 0
  %137 = vperm.xlu0 %136, %v64
  %v138 = vpop.permute.xlu0 %137
  %v155 = vunpack.c.l.b16 %v35
  %v156 = vunpack.c.l.b16 %v36
  %v157 = vunpack.c.l.b16 %v37
  %v158 = vunpack.c.l.b16 %v38
  %v159 = vunpack.c.l.b16 %v39
  %v160 = vunpack.c.l.b16 %v40
  %v161 = vunpack.c.l.b16 %v41
  %v162 = vunpack.c.l.b16 %v42
  %v163 = vunpack.c.l.b16 %v43
  %v164 = vunpack.c.l.b16 %v44
  %v165 = vunpack.c.l.b16 %v45
  %v166 = vunpack.c.l.b16 %v46
  %v167 = vunpack.c.l.b16 %v47
  %v168 = vunpack.c.l.b16 %v48
  %v169 = vunpack.c.l.b16 %v49
  %v170 = vpack.c.b16 %v156, %v155
  %v171 = vpack.c.b16 %v158, %v157
  %v172 = vpack.c.b16 %v160, %v159
  %v173 = vpack.c.b16 %v162, %v161
  %v174 = vpack.c.b16 %v164, %v163
  %v175 = vpack.c.b16 %v166, %v165
  %v176 = vpack.c.b16 %v168, %v167
  %v177 = vpack.c.b16 %v169, %v169
  %vm178 = vcmask 326656
  %v180 = vsel %vm178, %v170, 0
  %v183 = vsel %vm178, %v171, 0
  %v186 = vsel %vm178, %v172, 0
  %v189 = vsel %vm178, %v173, 0
  %v192 = vsel %vm178, %v174, 0
  %v195 = vsel %vm178, %v175, 0
  %v198 = vsel %vm178, %v176, 0
  %v201 = vsel %vm178, %v177, 0
  %v204 = vsel %vm178, %v34, 0
  %206 = vmatprep.subr.bf16.mxu0 0
  %207 = vmatpush1.bf16.xpose.msra.mxu0 %v204
  %208 = vmatprep.subr.bf16.mxu0 0
  %209 = vmatpush1.bf16.xpose.msra.mxu0 0
  %210 = vmatprep.subr.bf16.mxu0 0
  %211 = vmatpush1.bf16.xpose.msra.mxu0 0
  %212 = vmatprep.subr.bf16.mxu0 0
  %213 = vmatpush1.bf16.xpose.msra.mxu0 0
  %214 = vmatprep.subr.bf16.mxu0 0
  %215 = vmatpush1.bf16.xpose.msra.mxu0 0
  %216 = vmatprep.subr.bf16.mxu0 0
  %217 = vmatpush1.bf16.xpose.msra.mxu0 0
  %218 = vmatprep.subr.bf16.mxu0 0
  %219 = vmatpush1.bf16.xpose.msra.mxu0 0
  %220 = vmatprep.subr.bf16.mxu0 0
  %221 = vmatpush1.bf16.xpose.msra.mxu0 0
  %222 = vmatprep.subr.bf16.mxu0 0
  %223 = vmatpush1.bf16.xpose.msra.mxu0 0
  %224 = vmatprep.subr.bf16.mxu0 0
  %225 = vmatpush1.bf16.xpose.msra.mxu0 0
  %226 = vmatprep.subr.bf16.mxu0 0
  %227 = vmatpush1.bf16.xpose.msra.mxu0 0
  %228 = vmatprep.subr.bf16.mxu0 0
  %229 = vmatpush1.bf16.xpose.msra.mxu0 0
  %230 = vmatprep.subr.bf16.mxu0 0
  %231 = vmatpush1.bf16.xpose.msra.mxu0 0
  %232 = vmatprep.subr.bf16.mxu0 0
  %233 = vmatpush1.bf16.xpose.msra.mxu0 0
  %234 = vmatprep.subr.bf16.mxu0 0
  %235 = vmatpush1.bf16.xpose.msra.mxu0 0
  %236 = vmatprep.subr.bf16.mxu0 0
  %237 = vmatpush1.bf16.xpose.msra.mxu0 0
  %238 = vmatprep.mubr.bf16.mxu0 0
  %239 = vmatmul.mubr.bf16.gmra.mrb[0].mxu0 %v180
  %v240 = vpop.f32.mrb[0].mxu0
  %v241 = vadd.f32 %v68, %v240
  %v242 = vpop.f32.mrb[0].mxu0
  %v243 = vpop.f32.mrb[0].mxu0
  %v244 = vadd.f32 %v73, %v243
  %v245 = vpop.f32.mrb[0].mxu0
  %246 = vmatprep.mubr.bf16.mxu0 0
  %247 = vmatmul.mubr.bf16.gmra.mrb[0].mxu0 %v183
  %v248 = vpop.f32.mrb[0].mxu0
  %v249 = vadd.f32 %v78, %v248
  %v250 = vpop.f32.mrb[0].mxu0
  %v251 = vpop.f32.mrb[0].mxu0
  %v252 = vadd.f32 %v83, %v251
  %v253 = vpop.f32.mrb[0].mxu0
  %254 = vmatprep.mubr.bf16.mxu0 0
  %255 = vmatmul.mubr.bf16.gmra.mrb[0].mxu0 %v186
  %v256 = vpop.f32.mrb[0].mxu0
  %v257 = vadd.f32 %v88, %v256
  %v258 = vpop.f32.mrb[0].mxu0
  %v259 = vpop.f32.mrb[0].mxu0
  %v260 = vadd.f32 %v93, %v259
  %v261 = vpop.f32.mrb[0].mxu0
  %262 = vmatprep.mubr.bf16.mxu0 0
  %263 = vmatmul.mubr.bf16.gmra.mrb[0].mxu0 %v189
  %v264 = vpop.f32.mrb[0].mxu0
  %v265 = vadd.f32 %v98, %v264
  %v266 = vpop.f32.mrb[0].mxu0
  %v267 = vpop.f32.mrb[0].mxu0
  %v268 = vadd.f32 %v103, %v267
  %v269 = vpop.f32.mrb[0].mxu0
  %270 = vmatprep.mubr.bf16.mxu0 0
  %271 = vmatmul.mubr.bf16.gmra.mrb[0].mxu0 %v192
  %v272 = vpop.f32.mrb[0].mxu0
  %v273 = vadd.f32 %v108, %v272
  %v274 = vpop.f32.mrb[0].mxu0
  %v275 = vpop.f32.mrb[0].mxu0
  %v276 = vadd.f32 %v113, %v275
  %v277 = vpop.f32.mrb[0].mxu0
  %278 = vmatprep.mubr.bf16.mxu0 0
  %279 = vmatmul.mubr.bf16.gmra.mrb[0].mxu0 %v195
  %v280 = vpop.f32.mrb[0].mxu0
  %v281 = vadd.f32 %v118, %v280
  %v282 = vpop.f32.mrb[0].mxu0
  %v283 = vpop.f32.mrb[0].mxu0
  %v284 = vadd.f32 %v123, %v283
  %v285 = vpop.f32.mrb[0].mxu0
  %286 = vmatprep.mubr.bf16.mxu0 0
  %287 = vmatmul.mubr.bf16.gmra.mrb[0].mxu0 %v198
  %v288 = vpop.f32.mrb[0].mxu0
  %v289 = vadd.f32 %v128, %v288
  %v290 = vpop.f32.mrb[0].mxu0
  %v291 = vpop.f32.mrb[0].mxu0
  %v292 = vadd.f32 %v133, %v291
  %v293 = vpop.f32.mrb[0].mxu0
  %294 = vmatprep.mubr.bf16.mxu0 0
  %295 = vmatmul.mubr.bf16.gmra.mrb[0].mxu0 %v201
  %v296 = vpop.f32.mrb[0].mxu0
  %v297 = vadd.f32 %v138, %v296
  %v298 = vpop.f32.mrb[0].mxu0
  %v299 = vpop.f32.mrb[0].mxu0
  %v300 = vpop.f32.mrb[0].mxu0
  %301 = vdwg.mxu0
  %v302 = vmul.f32 %v241, 0.2
  %v303 = vmul.f32 %v244, 0.2
  %v304 = vmul.f32 %v249, 0.2
  %v305 = vmul.f32 %v252, 0.2
  %v306 = vmul.f32 %v257, 0.2
  %v307 = vmul.f32 %v260, 0.2
  %v308 = vmul.f32 %v265, 0.2
  %v309 = vmul.f32 %v268, 0.2
  %v310 = vmul.f32 %v273, 0.2
  %v311 = vmul.f32 %v276, 0.2
  %v312 = vmul.f32 %v281, 0.2
  %v313 = vmul.f32 %v284, 0.2
  %v314 = vmul.f32 %v289, 0.2
  %v315 = vmul.f32 %v292, 0.2
  %v316 = vmul.f32 %v297, 0.2
  %v317 = vmax.f32 %v241, %v302
  %v318 = vmax.f32 %v244, %v303
  %v319 = vmax.f32 %v249, %v304
  %v320 = vmax.f32 %v252, %v305
  %v321 = vmax.f32 %v257, %v306
  %v322 = vmax.f32 %v260, %v307
  %v323 = vmax.f32 %v265, %v308
  %v324 = vmax.f32 %v268, %v309
  %v325 = vmax.f32 %v273, %v310
  %v326 = vmax.f32 %v276, %v311
  %v327 = vmax.f32 %v281, %v312
  %v328 = vmax.f32 %v284, %v313
  %v329 = vmax.f32 %v289, %v314
  %v330 = vmax.f32 %v292, %v315
  %v331 = vmax.f32 %v297, %v316
  %v332 = vld [vmem:[%s3] sm:$0xf]
  %v333 = vld [vmem:[%s3 + $0x4] sm:$0xf]
  %v334 = vld [vmem:[%s3 + $0x8] sm:$0xf]
  %v335 = vld [vmem:[%s3 + $0xc] sm:$0xf]
  %v336 = vld [vmem:[%s3 + $0x10] sm:$0xf]
  %v337 = vld [vmem:[%s3 + $0x14] sm:$0xf]
  %v338 = vld [vmem:[%s3 + $0x18] sm:$0xf]
  %v339 = vld [vmem:[%s3 + $0x1c] sm:$0x3]
  %v340 = vpack.c.bf16 %v318, %v317
  %v341 = vpack.c.bf16 %v320, %v319
  %v342 = vpack.c.bf16 %v322, %v321
  %v343 = vpack.c.bf16 %v324, %v323
  %v344 = vpack.c.bf16 %v326, %v325
  %v345 = vpack.c.bf16 %v328, %v327
  %v346 = vpack.c.bf16 %v330, %v329
  %v347 = vpack.c.bf16 %v331, %v331
  %v348 = vld [vmem:[%s4] sm:$0xff]
  %v349 = vld [vmem:[%s4 + $0x8] sm:$0xff]
  %v350 = vld [vmem:[%s4 + $0x10] sm:$0xff]
  %v351 = vld [vmem:[%s4 + $0x18] sm:$0xff]
  %v352 = vld [vmem:[%s4 + $0x20] sm:$0xff]
  %v353 = vld [vmem:[%s4 + $0x28] sm:$0xff]
  %v354 = vld [vmem:[%s4 + $0x30] sm:$0xff]
  %v355 = vld [vmem:[%s4 + $0x38] sm:$0xf]
  %357 = vset.pattern.permute.xlu0 0
  %358 = vperm.xlu0 %357, %v348
  %v359 = vpop.permute.xlu0 %358
  %362 = vset.pattern.permute.xlu0 0
  %363 = vperm.xlu0 %362, %v349
  %v364 = vpop.permute.xlu0 %363
  %367 = vset.pattern.permute.xlu0 0
  %368 = vperm.xlu0 %367, %v350
  %v369 = vpop.permute.xlu0 %368
  %372 = vset.pattern.permute.xlu0 0
  %373 = vperm.xlu0 %372, %v351
  %v374 = vpop.permute.xlu0 %373
  %377 = vset.pattern.permute.xlu0 0
  %378 = vperm.xlu0 %377, %v352
  %v379 = vpop.permute.xlu0 %378
  %382 = vset.pattern.permute.xlu0 0
  %383 = vperm.xlu0 %382, %v353
  %v384 = vpop.permute.xlu0 %383
  %387 = vset.pattern.permute.xlu0 0
  %388 = vperm.xlu0 %387, %v354
  %v389 = vpop.permute.xlu0 %388
  %392 = vset.pattern.permute.xlu0 0
  %393 = vperm.xlu0 %392, %v355
  %v394 = vpop.permute.xlu0 %393
  %v404 = vunpack.c.l.b16 %v332
  %v405 = vunpack.c.l.b16 %v333
  %v406 = vunpack.c.l.b16 %v334
  %v407 = vunpack.c.l.b16 %v335
  %v408 = vunpack.c.l.b16 %v336
  %v409 = vunpack.c.l.b16 %v337
  %v410 = vunpack.c.l.b16 %v338
  %v411 = vunpack.c.l.b16 %v339
  %v412 = vpack.c.b16 %v405, %v404
  %v413 = vpack.c.b16 %v407, %v406
  %v414 = vpack.c.b16 %v409, %v408
  %v415 = vpack.c.b16 %v411, %v410
  %vm416 = vcmask 982016
  %v418 = vsel %vm416, %v412, 0
  %v421 = vsel %vm416, %v413, 0
  %v424 = vsel %vm416, %v414, 0
  %v427 = vsel %vm416, %v415, 0
  %vm429 = vcmask 1043456
  %v431 = vsel %vm429, %v347, 0
  %433 = vmatprep.subr.bf16.mxu0 0
  %434 = vmatpush1.bf16.msra.mxu0 %v340
  %435 = vmatprep.subr.bf16.mxu0 0
  %436 = vmatpush1.bf16.msra.mxu0 %v341
  %437 = vmatprep.subr.bf16.mxu0 0
  %438 = vmatpush1.bf16.msra.mxu0 %v342
  %439 = vmatprep.subr.bf16.mxu0 0
  %440 = vmatpush1.bf16.msra.mxu0 %v343
  %441 = vmatprep.subr.bf16.mxu0 0
  %442 = vmatpush1.bf16.msra.mxu0 %v344
  %443 = vmatprep.subr.bf16.mxu0 0
  %444 = vmatpush1.bf16.msra.mxu0 %v345
  %445 = vmatprep.subr.bf16.mxu0 0
  %446 = vmatpush1.bf16.msra.mxu0 %v346
  %447 = vmatprep.subr.bf16.mxu0 0
  %448 = vmatpush1.bf16.msra.mxu0 %v431
  %449 = vmatprep.subr.bf16.mxu0 0
  %450 = vmatpush1.bf16.msra.mxu0 0
  %451 = vmatprep.subr.bf16.mxu0 0
  %452 = vmatpush1.bf16.msra.mxu0 0
  %453 = vmatprep.subr.bf16.mxu0 0
  %454 = vmatpush1.bf16.msra.mxu0 0
  %455 = vmatprep.subr.bf16.mxu0 0
  %456 = vmatpush1.bf16.msra.mxu0 0
  %457 = vmatprep.subr.bf16.mxu0 0
  %458 = vmatpush1.bf16.msra.mxu0 0
  %459 = vmatprep.subr.bf16.mxu0 0
  %460 = vmatpush1.bf16.msra.mxu0 0
  %461 = vmatprep.subr.bf16.mxu0 0
  %462 = vmatpush1.bf16.msra.mxu0 0
  %463 = vmatprep.subr.bf16.mxu0 0
  %464 = vmatpush1.bf16.msra.mxu0 0
  %465 = vmatprep.mubr.bf16.mxu0 0
  %466 = vmatmul.mubr.bf16.gmra.mrb[0].mxu0 %v418
  %v467 = vpop.f32.mrb[0].mxu0
  %v468 = vadd.f32 %v359, %v467
  %v469 = vpop.f32.mrb[0].mxu0
  %v470 = vpop.f32.mrb[0].mxu0
  %v471 = vadd.f32 %v364, %v470
  %v472 = vpop.f32.mrb[0].mxu0
  %473 = vmatprep.mubr.bf16.mxu0 0
  %474 = vmatmul.mubr.bf16.gmra.mrb[0].mxu0 %v421
  %v475 = vpop.f32.mrb[0].mxu0
  %v476 = vadd.f32 %v369, %v475
  %v477 = vpop.f32.mrb[0].mxu0
  %v478 = vpop.f32.mrb[0].mxu0
  %v479 = vadd.f32 %v374, %v478
  %v480 = vpop.f32.mrb[0].mxu0
  %481 = vmatprep.mubr.bf16.mxu0 0
  %482 = vmatmul.mubr.bf16.gmra.mrb[0].mxu0 %v424
  %v483 = vpop.f32.mrb[0].mxu0
  %v484 = vadd.f32 %v379, %v483
  %v485 = vpop.f32.mrb[0].mxu0
  %v486 = vpop.f32.mrb[0].mxu0
  %v487 = vadd.f32 %v384, %v486
  %v488 = vpop.f32.mrb[0].mxu0
  %489 = vmatprep.mubr.bf16.mxu0 0
  %490 = vmatmul.mubr.bf16.gmra.mrb[0].mxu0 %v427
  %v491 = vpop.f32.mrb[0].mxu0
  %v492 = vadd.f32 %v389, %v491
  %v493 = vpop.f32.mrb[0].mxu0
  %v494 = vpop.f32.mrb[0].mxu0
  %v495 = vadd.f32 %v394, %v494
  %v496 = vpop.f32.mrb[0].mxu0
  %497 = vdwg.mxu0
  %v498 = vmul.f32 %v468, 0.2
  %v499 = vmul.f32 %v471, 0.2
  %v500 = vmul.f32 %v476, 0.2
  %v501 = vmul.f32 %v479, 0.2
  %v502 = vmul.f32 %v484, 0.2
  %v503 = vmul.f32 %v487, 0.2
  %v504 = vmul.f32 %v492, 0.2
  %v505 = vmul.f32 %v495, 0.2
  %v506 = vmax.f32 %v468, %v498
  %v507 = vmax.f32 %v471, %v499
  %v508 = vmax.f32 %v476, %v500
  %v509 = vmax.f32 %v479, %v501
  %v510 = vmax.f32 %v484, %v502
  %v511 = vmax.f32 %v487, %v503
  %v512 = vmax.f32 %v492, %v504
  %v513 = vmax.f32 %v495, %v505
  %v514 = vld [vmem:[%s5] sm:$0xf]
  %v515 = vld [vmem:[%s5 + $0x4] sm:$0xf]
  %v516 = vld [vmem:[%s5 + $0x8] sm:$0xf]
  %v517 = vld [vmem:[%s5 + $0xc] sm:$0xf]
  %v518 = vld [vmem:[%s5 + $0x10] sm:$0xf]
  %v519 = vpack.c.bf16 %v507, %v506
  %v520 = vpack.c.bf16 %v509, %v508
  %v521 = vpack.c.bf16 %v511, %v510
  %v522 = vpack.c.bf16 %v513, %v512
  %v523 = vld [vmem:[%s6] sm:$0xff]
  %v524 = vld [vmem:[%s6 + $0x8] sm:$0xff]
  %v525 = vld [vmem:[%s6 + $0x10] sm:$0xff]
  %v526 = vld [vmem:[%s6 + $0x18] sm:$0xff]
  %v527 = vld [vmem:[%s6 + $0x20] sm:$0xff]
  %529 = vset.pattern.permute.xlu0 0
  %530 = vperm.xlu0 %529, %v523
  %v531 = vpop.permute.xlu0 %530
  %534 = vset.pattern.permute.xlu0 0
  %535 = vperm.xlu0 %534, %v524
  %v536 = vpop.permute.xlu0 %535
  %539 = vset.pattern.permute.xlu0 0
  %540 = vperm.xlu0 %539, %v525
  %v541 = vpop.permute.xlu0 %540
  %544 = vset.pattern.permute.xlu0 0
  %545 = vperm.xlu0 %544, %v526
  %v546 = vpop.permute.xlu0 %545
  %549 = vset.pattern.permute.xlu0 0
  %550 = vperm.xlu0 %549, %v527
  %v551 = vpop.permute.xlu0 %550
  %v558 = vunpack.c.l.b16 %v514
  %v559 = vunpack.c.l.b16 %v515
  %v560 = vunpack.c.l.b16 %v516
  %v561 = vunpack.c.l.b16 %v517
  %v562 = vunpack.c.l.b16 %v518
  %v563 = vpack.c.b16 %v559, %v558
  %v564 = vpack.c.b16 %v561, %v560
  %v565 = vpack.c.b16 %v562, %v562
  %vm566 = vcmask 490496
  %v568 = vsel %vm566, %v563, 0
  %v571 = vsel %vm566, %v564, 0
  %v574 = vsel %vm566, %v565, 0
  %vm576 = vcmask 1045504
  %v578 = vsel %vm576, %v522, 0
  %580 = vmatprep.subr.bf16.mxu0 0
  %581 = vmatpush1.bf16.msra.mxu0 %v519
  %582 = vmatprep.subr.bf16.mxu0 0
  %583 = vmatpush1.bf16.msra.mxu0 %v520
  %584 = vmatprep.subr.bf16.mxu0 0
  %585 = vmatpush1.bf16.msra.mxu0 %v521
  %586 = vmatprep.subr.bf16.mxu0 0
  %587 = vmatpush1.bf16.msra.mxu0 %v578
  %588 = vmatprep.subr.bf16.mxu0 0
  %589 = vmatpush1.bf16.msra.mxu0 0
  %590 = vmatprep.subr.bf16.mxu0 0
  %591 = vmatpush1.bf16.msra.mxu0 0
  %592 = vmatprep.subr.bf16.mxu0 0
  %593 = vmatpush1.bf16.msra.mxu0 0
  %594 = vmatprep.subr.bf16.mxu0 0
  %595 = vmatpush1.bf16.msra.mxu0 0
  %596 = vmatprep.subr.bf16.mxu0 0
  %597 = vmatpush1.bf16.msra.mxu0 0
  %598 = vmatprep.subr.bf16.mxu0 0
  %599 = vmatpush1.bf16.msra.mxu0 0
  %600 = vmatprep.subr.bf16.mxu0 0
  %601 = vmatpush1.bf16.msra.mxu0 0
  %602 = vmatprep.subr.bf16.mxu0 0
  %603 = vmatpush1.bf16.msra.mxu0 0
  %604 = vmatprep.subr.bf16.mxu0 0
  %605 = vmatpush1.bf16.msra.mxu0 0
  %606 = vmatprep.subr.bf16.mxu0 0
  %607 = vmatpush1.bf16.msra.mxu0 0
  %608 = vmatprep.subr.bf16.mxu0 0
  %609 = vmatpush1.bf16.msra.mxu0 0
  %610 = vmatprep.subr.bf16.mxu0 0
  %611 = vmatpush1.bf16.msra.mxu0 0
  %612 = vmatprep.mubr.bf16.mxu0 0
  %613 = vmatmul.mubr.bf16.gmra.mrb[0].mxu0 %v568
  %v614 = vpop.f32.mrb[0].mxu0
  %v615 = vadd.f32 %v531, %v614
  %v616 = vpop.f32.mrb[0].mxu0
  %v617 = vpop.f32.mrb[0].mxu0
  %v618 = vadd.f32 %v536, %v617
  %v619 = vpop.f32.mrb[0].mxu0
  %620 = vmatprep.mubr.bf16.mxu0 0
  %621 = vmatmul.mubr.bf16.gmra.mrb[0].mxu0 %v571
  %v622 = vpop.f32.mrb[0].mxu0
  %v623 = vadd.f32 %v541, %v622
  %v624 = vpop.f32.mrb[0].mxu0
  %v625 = vpop.f32.mrb[0].mxu0
  %v626 = vadd.f32 %v546, %v625
  %v627 = vpop.f32.mrb[0].mxu0
  %628 = vmatprep.mubr.bf16.mxu0 0
  %629 = vmatmul.mubr.bf16.gmra.mrb[0].mxu0 %v574
  %v630 = vpop.f32.mrb[0].mxu0
  %v631 = vadd.f32 %v551, %v630
  %v632 = vpop.f32.mrb[0].mxu0
  %v633 = vpop.f32.mrb[0].mxu0
  %v634 = vpop.f32.mrb[0].mxu0
  %635 = vdwg.mxu0
  %v636 = vmul.f32 %v615, 0.2
  %v637 = vmul.f32 %v618, 0.2
  %v638 = vmul.f32 %v623, 0.2
  %v639 = vmul.f32 %v626, 0.2
  %v640 = vmul.f32 %v631, 0.2
  %v641 = vmax.f32 %v615, %v636
  %v642 = vmax.f32 %v618, %v637
  %v643 = vmax.f32 %v623, %v638
  %v644 = vmax.f32 %v626, %v639
  %v645 = vmax.f32 %v631, %v640
  %v646 = vld [vmem:[%s7] sm:$0x7]
  %v647 = vpack.c.bf16 %v642, %v641
  %v648 = vpack.c.bf16 %v644, %v643
  %v649 = vpack.c.bf16 %v645, %v645
  %v650 = vld [vmem:[%s8] sm:$0x1f]
  %652 = vset.pattern.permute.xlu0 0
  %653 = vperm.xlu0 %652, %v650
  %v654 = vpop.permute.xlu0 %653
  %v657 = vsel %vm178, %v646, 0
  %v660 = vsel %vm429, %v649, 0
  %662 = vmatprep.subr.bf16.mxu0 0
  %663 = vmatpush1.bf16.msra.mxu0 %v647
  %664 = vmatprep.subr.bf16.mxu0 0
  %665 = vmatpush1.bf16.msra.mxu0 %v648
  %666 = vmatprep.subr.bf16.mxu0 0
  %667 = vmatpush1.bf16.msra.mxu0 %v660
  %668 = vmatprep.subr.bf16.mxu0 0
  %669 = vmatpush1.bf16.msra.mxu0 0
  %670 = vmatprep.subr.bf16.mxu0 0
  %671 = vmatpush1.bf16.msra.mxu0 0
  %672 = vmatprep.subr.bf16.mxu0 0
  %673 = vmatpush1.bf16.msra.mxu0 0
  %674 = vmatprep.subr.bf16.mxu0 0
  %675 = vmatpush1.bf16.msra.mxu0 0
  %676 = vmatprep.subr.bf16.mxu0 0
  %677 = vmatpush1.bf16.msra.mxu0 0
  %678 = vmatprep.subr.bf16.mxu0 0
  %679 = vmatpush1.bf16.msra.mxu0 0
  %680 = vmatprep.subr.bf16.mxu0 0
  %681 = vmatpush1.bf16.msra.mxu0 0
  %682 = vmatprep.subr.bf16.mxu0 0
  %683 = vmatpush1.bf16.msra.mxu0 0
  %684 = vmatprep.subr.bf16.mxu0 0
  %685 = vmatpush1.bf16.msra.mxu0 0
  %686 = vmatprep.subr.bf16.mxu0 0
  %687 = vmatpush1.bf16.msra.mxu0 0
  %688 = vmatprep.subr.bf16.mxu0 0
  %689 = vmatpush1.bf16.msra.mxu0 0
  %690 = vmatprep.subr.bf16.mxu0 0
  %691 = vmatpush1.bf16.msra.mxu0 0
  %692 = vmatprep.subr.bf16.mxu0 0
  %693 = vmatpush1.bf16.msra.mxu0 0
  %694 = vmatprep.mubr.bf16.mxu0 0
  %695 = vmatmul.mubr.bf16.gmra.mrb[0].mxu0 %v657
  %v696 = vpop.f32.mrb[0].mxu0
  %v697 = vadd.f32 %v654, %v696
  %v698 = vpop.f32.mrb[0].mxu0
  %v699 = vpop.f32.mrb[0].mxu0
  %v700 = vpop.f32.mrb[0].mxu0
  %701 = vdwg.mxu0
  %v702 = vand.u32 2147483647, %v697
  %vm703 = vcmask 28672
  %704 = vst.msk [vmem:[%s9] sm:$0x1f] %vm703, %v702
  // Predicated region
  $region38: #{generator_xi_forward.1} parent=0 // pred_check
    _
  $region39: #{generator_xi_forward.1} parent=0 // pred_check_branch
    %706 = sbr.rel (0) target = $region41
  $region40: #{generator_xi_forward.1} parent=0 // pred_region
    _
  $region41: #{generator_xi_forward.1} parent=0 // pred_fallthru
    _
  // Predicated region
  $region42: #{generator_xi_forward.1} parent=0 // pred_check
    _
  $region43: #{generator_xi_forward.1} parent=0 // pred_check_branch
    %708 = sbr.rel (0) target = $region45
  $region44: #{generator_xi_forward.1} parent=0 // pred_region
    _
  $region45: #{generator_xi_forward.1} parent=0 // pred_fallthru
    _

</llo_original>
